<compile_context>
chip_gen: v6e
topology: v6e:2x2x1
jax: 0.10.0
libtpu: 0.0.40
codegen_flags: <defaults>
</compile_context>

<pallas_src>
import functools

import jax
import jax.numpy as jnp
from jax.experimental import pallas as pl
from jax.experimental.pallas import tpu as pltpu


def _residual_ln_dropout_kernel(seed_ref, x_ref, gamma_ref, beta_ref, o_ref,
                                *, eps: float, drop_p: float,
                                tile_rows: int, hidden: int):
    # --- LayerNorm over last dim (per row), f32 accumulation ---
    x = x_ref[...].astype(jnp.float32)                        # (TR, H)
    mean = jnp.mean(x, axis=-1, keepdims=True)
    xc = x - mean
    var = jnp.mean(xc * xc, axis=-1, keepdims=True)
    inv = jax.lax.rsqrt(var + eps)                            # EUP rsqrt, (TR, 1)
    scale = inv * gamma_ref[...].astype(jnp.float32)          # fold gamma into inv
    y = xc * scale + beta_ref[...].astype(jnp.float32)        # (TR, H)

    # --- Dropout (inverted dropout, training semantics) ---
    if drop_p > 0.0:
        # Counter-based hash PRNG: pure jnp integer ops, lowers on both Mosaic
        # TPU and the CPU interpreter (unlike pltpu.prng_*).  VALU-only work
        # that hides under the HBM-bound DMAs.
        row0 = (pl.program_id(0) * tile_rows).astype(jnp.int32)
        r = jax.lax.broadcasted_iota(jnp.int32, (tile_rows, hidden), 0)
        c = jax.lax.broadcasted_iota(jnp.int32, (tile_rows, hidden), 1)
        ctr = ((row0 + r) * jnp.int32(hidden) + c).astype(jnp.uint32)
        h = ctr ^ (seed_ref[0].astype(jnp.uint32) * jnp.uint32(0x9E3779B9))
        # murmur3 finalizer
        h = h ^ (h >> 16)
        h = h * jnp.uint32(0x85EBCA6B)
        h = h ^ (h >> 13)
        h = h * jnp.uint32(0xC2B2AE35)
        h = h ^ (h >> 16)
        thr = jnp.uint32(int(round(drop_p * (2.0 ** 32))) & 0xFFFFFFFF)
        keep = h >= thr                                       # P(keep) = 1 - drop_p
        inv_keep = 1.0 / (1.0 - drop_p)                       # folded Python const
        y = jnp.where(keep, y * inv_keep, 0.0)

    # --- Residual add ---
    o_ref[...] = (x + y).astype(o_ref.dtype)


def residual_connections(x, gamma, beta, seed, *, drop_p=0.1, eps=1e-5):
    """x: (B, S, H). Returns x + dropout(layernorm(x)) with training-mode dropout."""
    B, S, H = x.shape
    rows = B * S
    x2 = x.reshape(rows, H)

    # --- Row-tile sizing ---
    # Sublane packing minimum (f32: 8 rows, 16-bit dtypes: 16 rows).
    min_rows = 8 if x.dtype.itemsize >= 4 else 16
    dtype_bytes = x.dtype.itemsize
    # ~2 MiB per input block: large contiguous DMAs for the HBM roofline while
    # keeping 2x double-buffered in+out blocks + f32 intermediates comfortably
    # under the default scoped-VMEM limit on v5e/v6e/v7x.
    block_byte_budget = 2 << 20
    tr = block_byte_budget // max(1, H * dtype_bytes)
    tr = max(min_rows, min(tr, 2048))
    tr = (tr // min_rows) * min_rows
    # Don't exceed what the (rounded-up) row count needs.
    rows_rounded = ((rows + min_rows - 1) // min_rows) * min_rows
    tr = min(tr, rows_rounded)

    padded_rows = pl.cdiv(rows, tr) * tr
    if padded_rows != rows:
        x2 = jnp.pad(x2, ((0, padded_rows - rows), (0, 0)))

    gamma2 = gamma.reshape(1, H).astype(jnp.float32)
    beta2 = beta.reshape(1, H).astype(jnp.float32)
    seed_arr = jnp.asarray([seed], dtype=jnp.int32)

    kernel = functools.partial(_residual_ln_dropout_kernel,
                               eps=eps, drop_p=float(drop_p),
                               tile_rows=tr, hidden=H)

    out2 = pl.pallas_call(
        kernel,
        out_shape=jax.ShapeDtypeStruct((padded_rows, H), x.dtype),
        grid_spec=pltpu.PrefetchScalarGridSpec(
            num_scalar_prefetch=1,
            grid=(padded_rows // tr,),
            in_specs=[
                pl.BlockSpec((tr, H), lambda i, seed: (i, 0)),
                pl.BlockSpec((1, H), lambda i, seed: (0, 0)),   # gamma (constant block)
                pl.BlockSpec((1, H), lambda i, seed: (0, 0)),   # beta  (constant block)
            ],
            out_specs=pl.BlockSpec((tr, H), lambda i, seed: (i, 0)),
        ),
        compiler_params=pltpu.CompilerParams(
            dimension_semantics=("parallel",)),   # row tiles independent -> megacore on v7x
    )(seed_arr, x2, gamma2, beta2)

    if padded_rows != rows:
        out2 = out2[:rows]
    return out2.reshape(B, S, H)


if __name__ == "__main__":
    B, S, H = 2, 8, 32   # NOTE: H that is a multiple of 128 is the efficient case
    key = jax.random.PRNGKey(0)
    x = jax.random.normal(key, (B, S, H), dtype=jnp.float32)
    # PyTorch LayerNorm default init (ones / zeros), perturbed so affine is non-trivial.
    gamma = jnp.ones((H,), jnp.float32) + 0.01 * jnp.arange(H, dtype=jnp.float32)
    beta = 0.001 * jnp.arange(H, dtype=jnp.float32)

    # Correctness check with dropout disabled (deterministic path).
    out_nodrop = residual_connections(x, gamma, beta, seed=0, drop_p=0.0)
    jax.block_until_ready(out_nodrop)
    mu = jnp.mean(x, axis=-1, keepdims=True)
    va = jnp.mean((x - mu) ** 2, axis=-1, keepdims=True)
    ref = x + ((x - mu) * jax.lax.rsqrt(va + 1e-5) * gamma + beta)
    assert jnp.allclose(out_nodrop, ref, atol=1e-4, rtol=1e-4), "LayerNorm+residual mismatch"

    # Training-mode dropout path.
    out = residual_connections(x, gamma, beta, seed=1234, drop_p=0.1)
    jax.block_until_ready(out)
    assert out.shape == (B, S, H) and out.dtype == jnp.float32
    assert bool(jnp.all(jnp.isfinite(out)))
    # Each element is either the pure residual path (dropped: x) or the scaled
    # LN path (kept: x + ln/(1-p)); verify every element matches one of the two.
    ln = (x - mu) * jax.lax.rsqrt(va + 1e-5) * gamma + beta
    kept_ref = x + ln / (1.0 - 0.1)
    match = jnp.isclose(out, x, atol=1e-4) | jnp.isclose(out, kept_ref, atol=1e-4)
    assert bool(jnp.all(match)), "dropout output not in {x, x + ln/(1-p)}"
    print("KERNEL_OK")
</pallas_src>

<mosaic_0001>
module attributes {stable_mosaic.version = 11 : i64} {
  func.func @_residual_ln_dropout_kernel(%arg0: i32, %arg1: memref<1xi32, #tpu.memory_space<smem>>, %arg2: memref<16x32xf32, #tpu.memory_space<vmem>>, %arg3: memref<1x32xf32, #tpu.memory_space<vmem>>, %arg4: memref<1x32xf32, #tpu.memory_space<vmem>>, %arg5: memref<16x32xf32, #tpu.memory_space<vmem>>) attributes {dimension_semantics = [#tpu.dimension_semantics<parallel>], iteration_bounds = array<i64: 1>, scalar_prefetch = 1 : i64, scratch_operands = 0 : i64, tpu.core_type = #tpu.core_type<tc>, window_params = [{transform_indices = @transform_0, window_bounds = array<i64: 16, 32>}, {pipeline_mode = #tpu.pipeline_mode<synchronous>, transform_indices = @transform_1, window_bounds = array<i64: 1, 32>}, {pipeline_mode = #tpu.pipeline_mode<synchronous>, transform_indices = @transform_2, window_bounds = array<i64: 1, 32>}, {transform_indices = @transform_3, window_bounds = array<i64: 16, 32>}]} {
    %c0 = arith.constant 0 : index
    %c0_0 = arith.constant 0 : index
    %0 = vector.load %arg2[%c0, %c0_0] : memref<16x32xf32, #tpu.memory_space<vmem>>, vector<16x32xf32>
    %cst = arith.constant dense<0.000000e+00> : vector<16xf32>
    %1 = vector.multi_reduction <add>, %0, %cst [1] : vector<16x32xf32> to vector<16xf32>
    %2 = vector.shape_cast %1 : vector<16xf32> to vector<16x1xf32>
    %cst_1 = arith.constant 3.200000e+01 : f32
    %3 = vector.broadcast %cst_1 : f32 to vector<16x1xf32>
    %4 = arith.divf %2, %3 : vector<16x1xf32>
    %5 = vector.broadcast %4 : vector<16x1xf32> to vector<16x32xf32>
    %6 = arith.subf %0, %5 : vector<16x32xf32>
    %7 = arith.mulf %6, %6 : vector<16x32xf32>
    %cst_2 = arith.constant dense<0.000000e+00> : vector<16xf32>
    %8 = vector.multi_reduction <add>, %7, %cst_2 [1] : vector<16x32xf32> to vector<16xf32>
    %9 = vector.shape_cast %8 : vector<16xf32> to vector<16x1xf32>
    %cst_3 = arith.constant 3.200000e+01 : f32
    %10 = vector.broadcast %cst_3 : f32 to vector<16x1xf32>
    %11 = arith.divf %9, %10 : vector<16x1xf32>
    %cst_4 = arith.constant 9.99999974E-6 : f32
    %12 = vector.broadcast %cst_4 : f32 to vector<16x1xf32>
    %13 = arith.addf %11, %12 : vector<16x1xf32>
    %14 = math.rsqrt %13 : vector<16x1xf32>
    %c0_5 = arith.constant 0 : index
    %c0_6 = arith.constant 0 : index
    %15 = vector.load %arg3[%c0_5, %c0_6] : memref<1x32xf32, #tpu.memory_space<vmem>>, vector<1x32xf32>
    %16 = vector.broadcast %14 : vector<16x1xf32> to vector<16x32xf32>
    %17 = vector.broadcast %15 : vector<1x32xf32> to vector<16x32xf32>
    %18 = arith.mulf %16, %17 : vector<16x32xf32>
    %19 = arith.mulf %6, %18 : vector<16x32xf32>
    %c0_7 = arith.constant 0 : index
    %c0_8 = arith.constant 0 : index
    %20 = vector.load %arg4[%c0_7, %c0_8] : memref<1x32xf32, #tpu.memory_space<vmem>>, vector<1x32xf32>
    %21 = vector.broadcast %20 : vector<1x32xf32> to vector<16x32xf32>
    %22 = arith.addf %19, %21 : vector<16x32xf32>
    %23 = arith.addf %0, %22 : vector<16x32xf32>
    %c0_9 = arith.constant 0 : index
    %c0_10 = arith.constant 0 : index
    %24 = vector.load %arg5[%c0_9, %c0_10] : memref<16x32xf32, #tpu.memory_space<vmem>>, vector<16x32xf32>
    tpu.vector_store %arg5[%c0_9, %c0_10], %23 {strides = array<i32>} : memref<16x32xf32, #tpu.memory_space<vmem>>, vector<16x32xf32>,
    return
  }
  func.func @transform_0(%arg0: i32, %arg1: memref<1xi32, #tpu.memory_space<smem>>) -> (i32, i32) {
    %c0_i32 = arith.constant 0 : i32
    %c0_i32_0 = arith.constant 0 : i32
    return %arg0, %c0_i32 : i32, i32
  }
  func.func @transform_1(%arg0: i32, %arg1: memref<1xi32, #tpu.memory_space<smem>>) -> (i32, i32) {
    %c0_i32 = arith.constant 0 : i32
    %c0_i32_0 = arith.constant 0 : i32
    %c0_i32_1 = arith.constant 0 : i32
    return %c0_i32, %c0_i32_0 : i32, i32
  }
  func.func @transform_2(%arg0: i32, %arg1: memref<1xi32, #tpu.memory_space<smem>>) -> (i32, i32) {
    %c0_i32 = arith.constant 0 : i32
    %c0_i32_0 = arith.constant 0 : i32
    %c0_i32_1 = arith.constant 0 : i32
    return %c0_i32, %c0_i32_0 : i32, i32
  }
  func.func @transform_3(%arg0: i32, %arg1: memref<1xi32, #tpu.memory_space<smem>>) -> (i32, i32) {
    %c0_i32 = arith.constant 0 : i32
    %c0_i32_0 = arith.constant 0 : i32
    return %arg0, %c0_i32 : i32, i32
  }
}

</mosaic_0001>

<llo_original>
// kernel: tpu_custom_call.1
$region0: #{tpu_custom_call.1}
  #allocation0 [shape = 'u32[]', space=smem, size = 0x4, offset = 0x4, fixed_abs, tag = 'smem constant byte address 0x4 - core index']
  #allocation1 [shape = 'u32[144,128]{1,0:T(1,128)}', space=vmem, size = 0x12000, scoped, tag = 'internal scratch']
  #allocation2 [shape = 's32[1]{0}', space=sflag, size = 0x4, scoped, tag = 'scoped memory for tpu_custom_call.1']
  #allocation3 [shape = 's32[1]{0:T(128)S(6)}', space=smem, size = 0x200, scoped, tag = 'prefetched SMEM operand 0']
  %s0 = inlined_call_operand.<no memory space> [shape: s32[1], index: 0, kind: input, shape index: {}]
  %s1 = inlined_call_operand.hbm [shape: f32[16,32], index: 1, kind: input, shape index: {}]
  %s2 = inlined_call_operand.vmem [shape: f32[1,32], index: 2, kind: input, shape index: {}]
  %s3 = inlined_call_operand.vmem [shape: f32[1,32], index: 3, kind: input, shape index: {}]
  %s4 = inlined_call_operand.hbm [shape: f32[16,32], index: 4, kind: output, shape index: {}]
  %s5 = sld [smem:[#allocation0]]
  $region26: #{tpu_custom_call.1} parent=0
    _
  %s7 = ssub.s32 1, %s5
  %s8 = scalar_select 0, %s7, %s5
  %9 = sst [smem:[#allocation3]] %s0
  $region1: #{tpu_custom_call.1} parent=0
    #allocation4 [shape = 'u8[8192]{0}', space=vmem, size = 0x2000, scoped, tag = 'input window, operand 1, single buffered']
    #allocation5 [shape = 's32[1]{0}', space=sflag, size = 0x4, scoped, tag = 'scoped memory for tpu_custom_call.1']
    #allocation6 [shape = 's32[1]{0}', space=sflag, size = 0x4, scoped, tag = 'scoped memory for tpu_custom_call.1']
    #allocation7 [shape = 'u8[8192]{0}', space=vmem, size = 0x2000, scoped, tag = 'output window, operand 0, single buffered']
    %10 = vsyncpa [#allocation5], 0
    %11 = vsyncpa [#allocation6], 0
    // Predicated region
    $region2: #{tpu_custom_call.1} parent=1 // pred_check
      _
    $region3: #{tpu_custom_call.1} parent=1 // pred_check_branch
      %13 = sbr.rel (0) target = $region5
    $region4: #{tpu_custom_call.1} parent=1 // pred_region
      %s15 = ssub.s32 256, 256
      %16 = vsyncadd [#allocation5], %s15
      %s17 = sshll.u32 [#allocation4], 4
      %s18 = int_to_ptr.vmem [resolvable:$true] %s17
      %23 = dma.hbm_to_vmem [thread:$0]  %s1, 256, %s18, [#allocation5], 128, 128, 8
    $region5: #{tpu_custom_call.1} parent=1 // pred_fallthru
      _
    // Predicated region
    $region6: #{tpu_custom_call.1} parent=1 // pred_check
      _
    $region7: #{tpu_custom_call.1} parent=1 // pred_check_branch
      %25 = sbr.rel (0) target = $region9
    $region8: #{tpu_custom_call.1} parent=1 // pred_region
      _
    $region9: #{tpu_custom_call.1} parent=1 // pred_fallthru
      _
    // Predicated region
    $region10: #{tpu_custom_call.1} parent=1 // pred_check
      _
    $region11: #{tpu_custom_call.1} parent=1 // pred_check_branch
      %27 = sbr.rel (0) target = $region13
    $region12: #{tpu_custom_call.1} parent=1 // pred_region
      _
    $region13: #{tpu_custom_call.1} parent=1 // pred_fallthru
      _
    // Predicated region
    $region14: #{tpu_custom_call.1} parent=1 // pred_check
      _
    $region15: #{tpu_custom_call.1} parent=1 // pred_check_branch
      %29 = sbr.rel (0) target = $region17
    $region16: #{tpu_custom_call.1} parent=1 // pred_region
      %30 = dma.done [#allocation5], 256
    $region17: #{tpu_custom_call.1} parent=1 // pred_fallthru
      _
    %v31 = vld [vmem:[#allocation4] sm:$0xff]
    %v32 = vld [vmem:[#allocation4 + $0x8] sm:$0xff]
    %vm33 = vcmask 261120
    %v34 = vsel %vm33, %v31, 0.0
    %35 = vadd.xlane.f32.xlu0 %v34
    %v36 = vpop.xlane.xlu0 %35
    %v37 = vsel %vm33, %v32, 0.0
    %38 = vadd.xlane.f32.xlu0 %v37
    %v39 = vpop.xlane.xlu0 %38
    %v40 = vrcp.pop 32.0
    %v41 = vmul.f32 %v36, %v40
    %v42 = vmul.f32 %v39, %v40
    %v43 = vsub.f32 %v31, %v41
    %v44 = vsub.f32 %v32, %v42
    %v45 = vmul.f32 %v43, %v43
    %v46 = vmul.f32 %v44, %v44
    %v47 = vsel %vm33, %v45, 0.0
    %48 = vadd.xlane.f32.xlu0 %v47
    %v49 = vpop.xlane.xlu0 %48
    %v50 = vsel %vm33, %v46, 0.0
    %51 = vadd.xlane.f32.xlu0 %v50
    %v52 = vpop.xlane.xlu0 %51
    %v53 = vmul.f32 %v49, %v40
    %v54 = vmul.f32 %v52, %v40
    %v55 = vadd.f32 %v53, 1e-05
    %v56 = vadd.f32 %v54, 1e-05
    %v57 = vrsqrt.pop %v55
    %v58 = vrsqrt.pop %v56
    %v59 = vld [vmem:[%s2] sm:$0x1]
    %v61 = vlaneseq
    %v62 = vshrl.u32 %v61, 7
    %v63 = vsub.s32 0, %v62
    %v64 = vrot.slane %v59, %v63
    %v66 = vmul.f32 %v57, %v64
    %v67 = vmul.f32 %v58, %v64
    %v68 = vmul.f32 %v43, %v66
    %v69 = vmul.f32 %v44, %v67
    %v70 = vld [vmem:[%s3] sm:$0x1]
    %v72 = vlaneseq
    %v73 = vshrl.u32 %v72, 7
    %v74 = vsub.s32 0, %v73
    %v75 = vrot.slane %v70, %v74
    %v77 = vadd.f32 %v68, %v75
    %v78 = vadd.f32 %v69, %v75
    %v79 = vadd.f32 %v31, %v77
    %v80 = vadd.f32 %v32, %v78
    %81 = vst.msk [vmem:[#allocation7] sm:$0xff] %vm33, %v79
    %82 = vst.msk [vmem:[#allocation7 + $0x8] sm:$0xff] %vm33, %v80
    // Predicated region
    $region18: #{tpu_custom_call.1} parent=1 // pred_check
      _
    $region19: #{tpu_custom_call.1} parent=1 // pred_check_branch
      %84 = sbr.rel (0) target = $region21
    $region20: #{tpu_custom_call.1} parent=1 // pred_region
      %s86 = ssub.s32 256, 256
      %87 = vsyncadd [#allocation6], %s86
      %s88 = sshll.u32 [#allocation7], 4
      %s89 = int_to_ptr.vmem [resolvable:$true] %s88
      %94 = dma.vmem_to_hbm [thread:$0]  %s89, 256, %s4, [#allocation6], 128, 128, 8
    $region21: #{tpu_custom_call.1} parent=1 // pred_fallthru
      _
    // Predicated region
    $region22: #{tpu_custom_call.1} parent=1 // pred_check
      _
    $region23: #{tpu_custom_call.1} parent=1 // pred_check_branch
      %96 = sbr.rel (0) target = $region25
    $region24: #{tpu_custom_call.1} parent=1 // pred_region
      %97 = dma.done [#allocation6], 256
    $region25: #{tpu_custom_call.1} parent=1 // pred_fallthru
      _
    %98 = vsyncpa [#allocation5], 1
    %99 = vsyncpa [#allocation6], 1

</llo_original>
